<compile_context>
chip_gen: v5e
topology: v5e:2x2
jax: 0.10.0
libtpu: 0.0.40
codegen_flags: <defaults>
</compile_context>

<pallas_src>
import functools

import jax
import jax.numpy as jnp
import numpy as np
from jax.experimental import pallas as pl
from jax.experimental.pallas import tpu as pltpu

MARGIN = 1.0
EPS = 1e-6  # PyTorch F.pairwise_distance default eps


def _ranking_loss_kernel(states_ref, pos_ref, neg_ref, out_ref, *,
                         margin, eps, num_valid):
    # states_ref: (tb, D); pos_ref: (tb, P, D); neg_ref: (tb, K, D)
    x = states_ref[...].astype(jnp.float32)                 # (tb, D)
    pos = pos_ref[...].astype(jnp.float32)                   # (tb, P, D)
    neg = neg_ref[...].astype(jnp.float32)                   # (tb, K, D)
    tb, P, _ = pos.shape
    K = neg.shape[1]

    # Pairwise L2 distance with PyTorch's eps-on-difference convention.
    dp = x[:, None, :] - pos + eps                            # (tb, P, D)
    d_pos = jnp.sqrt(jnp.sum(dp * dp, axis=-1))               # (tb, P)
    dn = x[:, None, :] - neg + eps                            # (tb, K, D)
    d_neg = jnp.sqrt(jnp.sum(dn * dn, axis=-1))               # (tb, K)

    # Pair negative column j with positive column j % P by tiling the small
    # (tb, P) d_pos to (tb, K).  Only the tiny d_pos tensor is relaid out;
    # the big (tb, K, D) stream keeps its dense native layout.
    reps = -(-K // P)                                         # ceil(K / P), static
    d_pos_full = jnp.tile(d_pos, (1, reps))[:, :K]            # (tb, K)

    hinge = jnp.maximum(d_pos_full - d_neg + margin, 0.0)     # (tb, K)
    if num_valid < K:
        # Trailing partial chunk of negatives contributes nothing (matches the
        # reference's size-mismatch skip); masked in-kernel, no wrapper copy.
        col = jax.lax.broadcasted_iota(jnp.int32, (tb, K), 1)
        hinge = jnp.where(col < num_valid, hinge, 0.0)

    partial = jnp.sum(hinge)                                  # scalar f32
    # Lane-dense per-tile partial: full (1, 8, 128) block holds the partial sum
    # broadcast (unmasked vector store); wrapper reads [i, 0, 0] per tile.
    out_ref[...] = jnp.full(out_ref.shape, partial, out_ref.dtype)


def _pick_tile_b(B, P, K, D, itemsize):
    """Largest batch tile that keeps blocks legal (tile_b % 8 == 0 or tile_b == B,
    for the 2-D states block) and fits a conservative VMEM budget that is safe
    even on v7x (64 MiB physical / 32 MiB default scoped)."""
    vmem_budget = 8 * 1024 * 1024
    per_row = (1 + P + K) * D * itemsize          # streamed bytes per batch row
    # x2 double-buffered inputs, x2 headroom for f32 up-cast intermediates.
    for t in (512, 256, 128, 64, 32, 16, 8):
        if B % t == 0 and t * per_row * 4 <= vmem_budget:
            return t
    return B                                       # toy batches: one block


def ranking_loss(states, positives, negatives, margin=MARGIN):
    """Triplet ranking loss over a batch. Returns a float32 scalar."""
    B, D = states.shape
    _, P, _ = positives.shape
    _, K, _ = negatives.shape
    num_chunks = K // P
    if num_chunks == 0:
        # No full chunk of negatives -> reference contributes nothing.
        return jnp.zeros((), jnp.float32)
    num_valid = num_chunks * P                     # masked in-kernel if < K

    tile_b = _pick_tile_b(B, P, K, D, states.dtype.itemsize)
    grid_b = B // tile_b

    kernel = functools.partial(_ranking_loss_kernel, margin=float(margin),
                               eps=EPS, num_valid=num_valid)

    partials = pl.pallas_call(
        kernel,
        out_shape=jax.ShapeDtypeStruct((grid_b, 8, 128), jnp.float32),
        grid=(grid_b,),
        in_specs=[
            pl.BlockSpec((tile_b, D), lambda i: (i, 0)),
            pl.BlockSpec((tile_b, P, D), lambda i: (i, 0, 0)),
            pl.BlockSpec((tile_b, K, D), lambda i: (i, 0, 0)),
        ],
        out_specs=pl.BlockSpec((1, 8, 128), lambda i: (i, 0, 0)),
        compiler_params=pltpu.CompilerParams(
            dimension_semantics=("parallel",)),   # 2 TCs on v7x share the B axis
    )(states, positives, negatives)

    # One element per grid tile carries that tile's partial sum.
    return jnp.sum(partials[:, 0, 0])


def ranking_loss_ref(states, positives, negatives, margin=MARGIN, eps=EPS):
    """Pure-JAX reference mirroring RankingLoss.forward semantics."""
    P = positives.shape[1]
    K = negatives.shape[1]
    d_pos = jnp.sqrt(jnp.sum((states[:, None, :] - positives + eps) ** 2, -1))
    d_neg = jnp.sqrt(jnp.sum((states[:, None, :] - negatives + eps) ** 2, -1))
    total = jnp.zeros((), jnp.float32)
    for c in range(K // P):
        total = total + jnp.sum(
            jnp.maximum(d_pos - d_neg[:, c * P:(c + 1) * P] + margin, 0.0))
    return total


if __name__ == "__main__":
    # Small shapes consistent with the module: batch B, P positive persona
    # facts, K=20 negative candidates (module default), embedding dim D.
    B, P, K, D = 2, 4, 20, 32

    key = jax.random.PRNGKey(0)
    k_s, k_p, k_n = jax.random.split(key, 3)
    # TODO(synk): state_estimator text->embedding and random.sample negative
    # sampling are not tensor ops; embeddings are synthesized deterministically.
    states = jax.random.normal(k_s, (B, D), dtype=jnp.float32)
    positives = jax.random.normal(k_p, (B, P, D), dtype=jnp.float32)
    negatives = jax.random.normal(k_n, (B, K, D), dtype=jnp.float32)

    loss = jax.block_until_ready(ranking_loss(states, positives, negatives))
    ref = jax.block_until_ready(ranking_loss_ref(states, positives, negatives))
    np.testing.assert_allclose(np.asarray(loss), np.asarray(ref),
                               rtol=1e-5, atol=1e-5)

    # Also exercise the in-kernel mask for a trailing partial chunk (K % P != 0).
    negatives_partial = negatives[:, :18, :]
    loss_p = jax.block_until_ready(ranking_loss(states, positives, negatives_partial))
    ref_p = jax.block_until_ready(ranking_loss_ref(states, positives, negatives_partial))
    np.testing.assert_allclose(np.asarray(loss_p), np.asarray(ref_p),
                               rtol=1e-5, atol=1e-5)

    print("KERNEL_OK")
</pallas_src>

<mosaic_0001>
module attributes {stable_mosaic.version = 11 : i64} {
  func.func @_ranking_loss_kernel(%arg0: i32, %arg1: memref<2x32xf32, #tpu.memory_space<vmem>>, %arg2: memref<2x4x32xf32, #tpu.memory_space<vmem>>, %arg3: memref<2x20x32xf32, #tpu.memory_space<vmem>>, %arg4: memref<1x8x128xf32, #tpu.memory_space<vmem>>) attributes {dimension_semantics = [#tpu.dimension_semantics<parallel>], iteration_bounds = array<i64: 1>, scalar_prefetch = 0 : i64, scratch_operands = 0 : i64, tpu.core_type = #tpu.core_type<tc>, window_params = [{transform_indices = @transform_0, window_bounds = array<i64: 2, 32>}, {transform_indices = @transform_1, window_bounds = array<i64: 2, 4, 32>}, {transform_indices = @transform_2, window_bounds = array<i64: 2, 20, 32>}, {transform_indices = @transform_3, window_bounds = array<i64: 1, 8, 128>}]} {
    %c0 = arith.constant 0 : index
    %c0_0 = arith.constant 0 : index
    %0 = vector.load %arg1[%c0, %c0_0] : memref<2x32xf32, #tpu.memory_space<vmem>>, vector<2x32xf32>
    %c0_1 = arith.constant 0 : index
    %c0_2 = arith.constant 0 : index
    %c0_3 = arith.constant 0 : index
    %1 = vector.load %arg2[%c0_1, %c0_2, %c0_3] : memref<2x4x32xf32, #tpu.memory_space<vmem>>, vector<2x4x32xf32>
    %c0_4 = arith.constant 0 : index
    %c0_5 = arith.constant 0 : index
    %c0_6 = arith.constant 0 : index
    %2 = vector.load %arg3[%c0_4, %c0_5, %c0_6] : memref<2x20x32xf32, #tpu.memory_space<vmem>>, vector<2x20x32xf32>
    %3 = vector.shape_cast %0 : vector<2x32xf32> to vector<2x1x32xf32>
    %4 = vector.broadcast %3 : vector<2x1x32xf32> to vector<2x4x32xf32>
    %5 = arith.subf %4, %1 : vector<2x4x32xf32>
    %cst = arith.constant 9.99999997E-7 : f32
    %6 = vector.broadcast %cst : f32 to vector<2x4x32xf32>
    %7 = arith.addf %5, %6 : vector<2x4x32xf32>
    %8 = arith.mulf %7, %7 : vector<2x4x32xf32>
    %cst_7 = arith.constant dense<0.000000e+00> : vector<2x4xf32>
    %9 = vector.multi_reduction <add>, %8, %cst_7 [2] : vector<2x4x32xf32> to vector<2x4xf32>
    %10 = math.sqrt %9 : vector<2x4xf32>
    %11 = vector.shape_cast %0 : vector<2x32xf32> to vector<2x1x32xf32>
    %12 = vector.broadcast %11 : vector<2x1x32xf32> to vector<2x20x32xf32>
    %13 = arith.subf %12, %2 : vector<2x20x32xf32>
    %cst_8 = arith.constant 9.99999997E-7 : f32
    %14 = vector.broadcast %cst_8 : f32 to vector<2x20x32xf32>
    %15 = arith.addf %13, %14 : vector<2x20x32xf32>
    %16 = arith.mulf %15, %15 : vector<2x20x32xf32>
    %cst_9 = arith.constant dense<0.000000e+00> : vector<2x20xf32>
    %17 = vector.multi_reduction <add>, %16, %cst_9 [2] : vector<2x20x32xf32> to vector<2x20xf32>
    %18 = math.sqrt %17 : vector<2x20xf32>
    %19 = tpu.concatenate %10, %10, %10, %10, %10 in 1 : vector<2x4xf32>, vector<2x4xf32>, vector<2x4xf32>, vector<2x4xf32>, vector<2x4xf32> -> vector<2x20xf32>
    %20 = arith.subf %19, %18 : vector<2x20xf32>
    %cst_10 = arith.constant 1.000000e+00 : f32
    %21 = vector.broadcast %cst_10 : f32 to vector<2x20xf32>
    %22 = arith.addf %20, %21 : vector<2x20xf32>
    %cst_11 = arith.constant 0.000000e+00 : f32
    %23 = vector.broadcast %cst_11 : f32 to vector<2x20xf32>
    %24 = arith.maximumf %22, %23 : vector<2x20xf32>
    %25 = vector.shape_cast %24 : vector<2x20xf32> to vector<1x2x20xf32>
    %cst_12 = arith.constant dense<0.000000e+00> : vector<1xf32>
    %26 = vector.multi_reduction <add>, %25, %cst_12 [1, 2] : vector<1x2x20xf32> to vector<1xf32>
    %27 = vector.shape_cast %26 : vector<1xf32> to vector<1x1x1xf32>
    %28 = vector.extract %27[0, 0, 0] : f32 from vector<1x1x1xf32>
    %29 = vector.broadcast %28 : f32 to vector<1x8x128xf32>
    %c0_13 = arith.constant 0 : index
    %c0_14 = arith.constant 0 : index
    %c0_15 = arith.constant 0 : index
    %30 = vector.load %arg4[%c0_13, %c0_14, %c0_15] : memref<1x8x128xf32, #tpu.memory_space<vmem>>, vector<1x8x128xf32>
    tpu.vector_store %arg4[%c0_13, %c0_14, %c0_15], %29 {strides = array<i32>} : memref<1x8x128xf32, #tpu.memory_space<vmem>>, vector<1x8x128xf32>,
    return
  }
  func.func @transform_0(%arg0: i32) -> (i32, i32) {
    %c0_i32 = arith.constant 0 : i32
    %c0_i32_0 = arith.constant 0 : i32
    return %arg0, %c0_i32 : i32, i32
  }
  func.func @transform_1(%arg0: i32) -> (i32, i32, i32) {
    %c0_i32 = arith.constant 0 : i32
    %c0_i32_0 = arith.constant 0 : i32
    %c0_i32_1 = arith.constant 0 : i32
    return %arg0, %c0_i32, %c0_i32_0 : i32, i32, i32
  }
  func.func @transform_2(%arg0: i32) -> (i32, i32, i32) {
    %c0_i32 = arith.constant 0 : i32
    %c0_i32_0 = arith.constant 0 : i32
    %c0_i32_1 = arith.constant 0 : i32
    return %arg0, %c0_i32, %c0_i32_0 : i32, i32, i32
  }
  func.func @transform_3(%arg0: i32) -> (i32, i32, i32) {
    %c0_i32 = arith.constant 0 : i32
    %c0_i32_0 = arith.constant 0 : i32
    %c0_i32_1 = arith.constant 0 : i32
    return %arg0, %c0_i32, %c0_i32_0 : i32, i32, i32
  }
}

</mosaic_0001>

<llo_original>
// kernel: tpu_custom_call.1
$region0: #{tpu_custom_call.1}
  #allocation0 [shape = 'u32[]', space=smem, size = 0x4, offset = 0x4, fixed_abs, tag = 'smem constant byte address 0x4 - core index']
  #allocation1 [shape = 'u32[72,128]{1,0:T(1,128)}', space=vmem, size = 0x9000, scoped, tag = 'internal scratch']
  %s0 = inlined_call_operand.vmem [shape: f32[2,32], index: 0, kind: input, shape index: {}]
  %s1 = inlined_call_operand.vmem [shape: f32[2,4,32], index: 1, kind: input, shape index: {}]
  %s2 = inlined_call_operand.vmem [shape: f32[2,20,32], index: 2, kind: input, shape index: {}]
  %s3 = inlined_call_operand.hbm [shape: f32[1,8,128], index: 3, kind: output, shape index: {}]
  %s4 = sld [smem:[#allocation0]]
  $region22: #{tpu_custom_call.1} parent=0
    _
  %s6 = ssub.s32 1, %s4
  %s7 = scalar_select 0, %s6, %s4
  $region1: #{tpu_custom_call.1} parent=0
    #allocation2 [shape = 'u8[4096]{0}', space=vmem, size = 0x1000, scoped, tag = 'output window, operand 0, single buffered']
    #allocation3 [shape = 's32[1]{0}', space=sflag, size = 0x4, scoped, tag = 'scoped memory for tpu_custom_call.1']
    %8 = vsyncpa [#allocation3], 0
    // Predicated region
    $region2: #{tpu_custom_call.1} parent=1 // pred_check
      _
    $region3: #{tpu_custom_call.1} parent=1 // pred_check_branch
      %10 = sbr.rel (0) target = $region5
    $region4: #{tpu_custom_call.1} parent=1 // pred_region
      _
    $region5: #{tpu_custom_call.1} parent=1 // pred_fallthru
      _
    // Predicated region
    $region6: #{tpu_custom_call.1} parent=1 // pred_check
      _
    $region7: #{tpu_custom_call.1} parent=1 // pred_check_branch
      %12 = sbr.rel (0) target = $region9
    $region8: #{tpu_custom_call.1} parent=1 // pred_region
      _
    $region9: #{tpu_custom_call.1} parent=1 // pred_fallthru
      _
    // Predicated region
    $region10: #{tpu_custom_call.1} parent=1 // pred_check
      _
    $region11: #{tpu_custom_call.1} parent=1 // pred_check_branch
      %14 = sbr.rel (0) target = $region13
    $region12: #{tpu_custom_call.1} parent=1 // pred_region
      _
    $region13: #{tpu_custom_call.1} parent=1 // pred_fallthru
      _
    %v15 = vld [vmem:[%s0] sm:$0x3]
    %v16 = vld [vmem:[%s1] sm:$0xf]
    %v17 = vld [vmem:[%s1 + $0x4] sm:$0xf]
    %v18 = vld [vmem:[%s2] sm:$0xff]
    %v19 = vld [vmem:[%s2 + $0x8] sm:$0xff]
    %v20 = vld [vmem:[%s2 + $0x10] sm:$0xf]
    %v21 = vld [vmem:[%s2 + $0x18] sm:$0xff]
    %v22 = vld [vmem:[%s2 + $0x20] sm:$0xff]
    %v23 = vld [vmem:[%s2 + $0x28] sm:$0xf]
    %v25 = vrot.slane %v15, 1
    %v26 = vperm.slane %v15, 0
    %v27 = vperm.slane %v25, 0
    %v30 = vsub.f32 %v26, %v16
    %v31 = vsub.f32 %v27, %v17
    %v32 = vadd.f32 %v30, 1e-06
    %v33 = vadd.f32 %v31, 1e-06
    %v34 = vmul.f32 %v32, %v32
    %v35 = vmul.f32 %v33, %v33
    %vm36 = vcmask 257024
    %v37 = vsel %vm36, %v34, 0.0
    %38 = vadd.xlane.f32.xlu0 %v37
    %v39 = vpop.xlane.xlu0 %38
    %v40 = vsel %vm36, %v35, 0.0
    %41 = vadd.xlane.f32.xlu0 %v40
    %v42 = vpop.xlane.xlu0 %41
    %v43 = vrsqrt.pop %v39
    %v44 = vmul.f32 %v43, %v39
    %v45 = vmul.f32 %v44, %v43
    %v46 = vmul.f32 0.5, %v45
    %v47 = vsub.f32 1.5, %v46
    %v48 = vmul.f32 %v43, %v47
    %v49 = vmul.f32 %v39, %v48
    %vm50 = vcmp.eq.f32.partialorder %v39, inf
    %v51 = vsel %vm50, %v39, %v49
    %vm52 = vcmp.eq.f32.partialorder %v39, 0.0
    %v53 = vand.u32 %v39, 2147483648
    %v54 = vsel %vm52, %v53, %v51
    %v55 = vrsqrt.pop %v42
    %v56 = vmul.f32 %v55, %v42
    %v57 = vmul.f32 %v56, %v55
    %v58 = vmul.f32 0.5, %v57
    %v59 = vsub.f32 1.5, %v58
    %v60 = vmul.f32 %v55, %v59
    %v61 = vmul.f32 %v42, %v60
    %vm62 = vcmp.eq.f32.partialorder %v42, inf
    %v63 = vsel %vm62, %v42, %v61
    %vm64 = vcmp.eq.f32.partialorder %v42, 0.0
    %v65 = vand.u32 %v42, 2147483648
    %v66 = vsel %vm64, %v65, %v63
    %v67 = vsub.f32 %v26, %v18
    %v68 = vsub.f32 %v26, %v19
    %v69 = vsub.f32 %v26, %v20
    %v70 = vsub.f32 %v27, %v21
    %v71 = vsub.f32 %v27, %v22
    %v72 = vsub.f32 %v27, %v23
    %v73 = vadd.f32 %v67, 1e-06
    %v74 = vadd.f32 %v68, 1e-06
    %v75 = vadd.f32 %v69, 1e-06
    %v76 = vadd.f32 %v70, 1e-06
    %v77 = vadd.f32 %v71, 1e-06
    %v78 = vadd.f32 %v72, 1e-06
    %v79 = vmul.f32 %v73, %v73
    %v80 = vmul.f32 %v74, %v74
    %v81 = vmul.f32 %v75, %v75
    %v82 = vmul.f32 %v76, %v76
    %v83 = vmul.f32 %v77, %v77
    %v84 = vmul.f32 %v78, %v78
    %vm85 = vcmask 261120
    %v86 = vsel %vm85, %v79, 0.0
    %87 = vadd.xlane.f32.xlu0 %v86
    %v88 = vpop.xlane.xlu0 %87
    %v89 = vsel %vm85, %v80, 0.0
    %90 = vadd.xlane.f32.xlu0 %v89
    %v91 = vpop.xlane.xlu0 %90
    %v92 = vsel %vm36, %v81, 0.0
    %93 = vadd.xlane.f32.xlu0 %v92
    %v94 = vpop.xlane.xlu0 %93
    %v95 = vsel %vm85, %v82, 0.0
    %96 = vadd.xlane.f32.xlu0 %v95
    %v97 = vpop.xlane.xlu0 %96
    %v98 = vsel %vm85, %v83, 0.0
    %99 = vadd.xlane.f32.xlu0 %v98
    %v100 = vpop.xlane.xlu0 %99
    %v101 = vsel %vm36, %v84, 0.0
    %102 = vadd.xlane.f32.xlu0 %v101
    %v103 = vpop.xlane.xlu0 %102
    %v104 = vrsqrt.pop %v88
    %v105 = vmul.f32 %v104, %v88
    %v106 = vmul.f32 %v105, %v104
    %v107 = vmul.f32 0.5, %v106
    %v108 = vsub.f32 1.5, %v107
    %v109 = vmul.f32 %v104, %v108
    %v110 = vmul.f32 %v88, %v109
    %vm111 = vcmp.eq.f32.partialorder %v88, inf
    %v112 = vsel %vm111, %v88, %v110
    %vm113 = vcmp.eq.f32.partialorder %v88, 0.0
    %v114 = vand.u32 %v88, 2147483648
    %v115 = vsel %vm113, %v114, %v112
    %v116 = vrsqrt.pop %v91
    %v117 = vmul.f32 %v116, %v91
    %v118 = vmul.f32 %v117, %v116
    %v119 = vmul.f32 0.5, %v118
    %v120 = vsub.f32 1.5, %v119
    %v121 = vmul.f32 %v116, %v120
    %v122 = vmul.f32 %v91, %v121
    %vm123 = vcmp.eq.f32.partialorder %v91, inf
    %v124 = vsel %vm123, %v91, %v122
    %vm125 = vcmp.eq.f32.partialorder %v91, 0.0
    %v126 = vand.u32 %v91, 2147483648
    %v127 = vsel %vm125, %v126, %v124
    %v128 = vrsqrt.pop %v94
    %v129 = vmul.f32 %v128, %v94
    %v130 = vmul.f32 %v129, %v128
    %v131 = vmul.f32 0.5, %v130
    %v132 = vsub.f32 1.5, %v131
    %v133 = vmul.f32 %v128, %v132
    %v134 = vmul.f32 %v94, %v133
    %vm135 = vcmp.eq.f32.partialorder %v94, inf
    %v136 = vsel %vm135, %v94, %v134
    %vm137 = vcmp.eq.f32.partialorder %v94, 0.0
    %v138 = vand.u32 %v94, 2147483648
    %v139 = vsel %vm137, %v138, %v136
    %v140 = vrsqrt.pop %v97
    %v141 = vmul.f32 %v140, %v97
    %v142 = vmul.f32 %v141, %v140
    %v143 = vmul.f32 0.5, %v142
    %v144 = vsub.f32 1.5, %v143
    %v145 = vmul.f32 %v140, %v144
    %v146 = vmul.f32 %v97, %v145
    %vm147 = vcmp.eq.f32.partialorder %v97, inf
    %v148 = vsel %vm147, %v97, %v146
    %vm149 = vcmp.eq.f32.partialorder %v97, 0.0
    %v150 = vand.u32 %v97, 2147483648
    %v151 = vsel %vm149, %v150, %v148
    %v152 = vrsqrt.pop %v100
    %v153 = vmul.f32 %v152, %v100
    %v154 = vmul.f32 %v153, %v152
    %v155 = vmul.f32 0.5, %v154
    %v156 = vsub.f32 1.5, %v155
    %v157 = vmul.f32 %v152, %v156
    %v158 = vmul.f32 %v100, %v157
    %vm159 = vcmp.eq.f32.partialorder %v100, inf
    %v160 = vsel %vm159, %v100, %v158
    %vm161 = vcmp.eq.f32.partialorder %v100, 0.0
    %v162 = vand.u32 %v100, 2147483648
    %v163 = vsel %vm161, %v162, %v160
    %v164 = vrsqrt.pop %v103
    %v165 = vmul.f32 %v164, %v103
    %v166 = vmul.f32 %v165, %v164
    %v167 = vmul.f32 0.5, %v166
    %v168 = vsub.f32 1.5, %v167
    %v169 = vmul.f32 %v164, %v168
    %v170 = vmul.f32 %v103, %v169
    %vm171 = vcmp.eq.f32.partialorder %v103, inf
    %v172 = vsel %vm171, %v103, %v170
    %vm173 = vcmp.eq.f32.partialorder %v103, 0.0
    %v174 = vand.u32 %v103, 2147483648
    %v175 = vsel %vm173, %v174, %v172
    %v178 = vlaneseq
    %v179 = vand.u32 %v178, 127
    %v180 = vperm.slane %v54, %v179
    %v181 = vperm.slane %v66, %v179
    %vm182 = vcmask 1041409
    %v183 = vsel %vm182, %v181, %v180
    %v185 = vadd.s32 %v179, 4294967292
    %v186 = vperm.slane %v54, %v185
    %v187 = vperm.slane %v66, %v185
    %v188 = vsel %vm182, %v187, %v186
    %v190 = vadd.s32 %v179, 4294967288
    %v191 = vperm.slane %v54, %v190
    %v192 = vperm.slane %v66, %v190
    %v193 = vsel %vm182, %v192, %v191
    %v195 = vadd.s32 %v179, 4294967284
    %v196 = vperm.slane %v54, %v195
    %v197 = vperm.slane %v66, %v195
    %v198 = vsel %vm182, %v197, %v196
    %v200 = vadd.s32 %v179, 4294967280
    %v201 = vperm.slane %v54, %v200
    %v202 = vperm.slane %v66, %v200
    %v203 = vsel %vm182, %v202, %v201
    %vm205 = vcmask 31744
    %v206 = vsel %vm205, %v183, %v188
    %vm207 = vcmask 64512
    %v208 = vsel %vm207, %v206, %v193
    %vm209 = vcmask 97280
    %v210 = vsel %vm209, %v208, %v198
    %vm211 = vcmask 130048
    %v212 = vsel %vm211, %v210, %v203
    %v219 = vperm.slane %v115, %v179
    %v220 = vperm.slane %v127, %v190
    %vm221 = vcmask 130112
    %v222 = vsel %vm221, %v220, %v219
    %v223 = vperm.slane %v139, %v200
    %vm224 = vcmask 195712
    %v225 = vsel %vm224, %v223, %v222
    %v226 = vperm.slane %v151, %v179
    %v227 = vperm.slane %v163, %v190
    %v228 = vsel %vm221, %v227, %v226
    %v229 = vperm.slane %v175, %v200
    %v230 = vsel %vm224, %v229, %v228
    %v231 = vsel %vm182, %v230, %v225
    %v233 = vsub.f32 %v212, %v231
    %v234 = vadd.f32 %v233, 1.0
    %v235 = vmax.f32 %v234, 0.0
    %vm236 = vcmask 156672
    %v237 = vsel %vm236, %v235, 0.0
    %238 = vadd.xlane.f32.xlu0 %v237
    %v239 = vpop.xlane.xlu0 %238
    %v240 = vrot.slane %v239, 4
    %v241 = vadd.f32 %v239, %v240
    %v242 = vrot.slane %v241, 2
    %v243 = vadd.f32 %v241, %v242
    %v244 = vrot.slane %v243, 1
    %v245 = vadd.f32 %v243, %v244
    %s246 = vtos %v245
    %v247 = vstv %s246
    %248 = vst [vmem:[#allocation2] sm:$0xff] %v247
    // Predicated region
    $region14: #{tpu_custom_call.1} parent=1 // pred_check
      _
    $region15: #{tpu_custom_call.1} parent=1 // pred_check_branch
      %250 = sbr.rel (0) target = $region17
    $region16: #{tpu_custom_call.1} parent=1 // pred_region
      %252 = vsyncadd [#allocation3], 0
      %s254 = sshll.u32 [#allocation2], 4
      %s255 = int_to_ptr.vmem [resolvable:$true] %s254
      %s256 = sshll.u32 %s3, 4
      %s257 = int_to_ptr.hbm [resolvable:$true] %s256
      %259 = dma.vmem_to_hbm [thread:$0]  %s255, 128, %s257, [#allocation3]
    $region17: #{tpu_custom_call.1} parent=1 // pred_fallthru
      _
    // Predicated region
    $region18: #{tpu_custom_call.1} parent=1 // pred_check
      _
    $region19: #{tpu_custom_call.1} parent=1 // pred_check_branch
      %261 = sbr.rel (0) target = $region21
    $region20: #{tpu_custom_call.1} parent=1 // pred_region
      %263 = dma.done [#allocation3], 128
    $region21: #{tpu_custom_call.1} parent=1 // pred_fallthru
      _
    %264 = vsyncpa [#allocation3], 1

</llo_original>
